<compile_context>
chip_gen: v6e
topology: v6e:2x2x1
jax: 0.10.0
libtpu: 0.0.40
codegen_flags: <defaults>
</compile_context>

<pallas_src>
import jax
import jax.numpy as jnp
from jax.experimental import pallas as pl
from jax.experimental.pallas import tpu as pltpu

S, B, C = 7, 2, 20
CH = C + 5 * B  # 30
_LANE = 128
_MAX_TILE_ROWS = 512  # 512 rows x 128 lanes = 64K cells per block per channel


def _yolo_iou_kernel(box_ref, out_ref):
    # box_ref: (12, T, 128) f32 channel planes:
    #   0..3  = pred box 1 (x, y, w, h)
    #   4..7  = pred box 2 (x, y, w, h)
    #   8..11 = target box (x, y, w, h)
    # Each box_ref[i] is a dense (T, 128) plane -> full-vreg VPU ops only.
    tx, ty, tw, th = box_ref[8], box_ref[9], box_ref[10], box_ref[11]
    tx1 = tx - tw * 0.5
    tx2 = tx + tw * 0.5
    ty1 = ty - th * 0.5
    ty2 = ty + th * 0.5
    t_area = jnp.abs((tx2 - tx1) * (ty2 - ty1))

    def _iou(px, py, pw, ph):
        px1 = px - pw * 0.5
        px2 = px + pw * 0.5
        py1 = py - ph * 0.5
        py2 = py + ph * 0.5
        iw = jnp.maximum(jnp.minimum(px2, tx2) - jnp.maximum(px1, tx1), 0.0)
        ih = jnp.maximum(jnp.minimum(py2, ty2) - jnp.maximum(py1, ty1), 0.0)
        inter = iw * ih
        p_area = jnp.abs((px2 - px1) * (py2 - py1))
        # Exact divide: pl.reciprocal(approx=True) would offload to the EUP
        # but risks the 1e-5 tolerance; kernel is memory-bound so it's hidden.
        return inter / (p_area + t_area - inter + 1e-6)

    iou1 = _iou(box_ref[0], box_ref[1], box_ref[2], box_ref[3])
    iou2 = _iou(box_ref[4], box_ref[5], box_ref[6], box_ref[7])

    out_ref[0] = jnp.maximum(iou1, iou2)
    # torch.max(dim=0) / argmax tie-break -> index 0 on ties: 1 only if iou2 > iou1.
    out_ref[1] = (iou2 > iou1).astype(jnp.float32)


def yolo_loss_forward(predictions, target):
    """Mirrors YoloLoss.forward up to (iou_maxes, bestbox).

    predictions: (N, S*S*(C+5B)) or any shape reshapable to (-1, S, S, 30)
    target:      (N, S, S, 30)
    returns: iou_maxes (N, S, S, 1) float32, bestbox (N, S, S, 1) int32
    """
    pred4 = predictions.reshape(-1, S, S, CH)
    targ4 = target.reshape(-1, S, S, CH)
    N = pred4.shape[0]
    M = N * S * S

    # Gather only the 12 channels the kernel reads; cast after slicing so we
    # never materialize an f32 copy of the unused channels.
    p1 = pred4[..., 21:25].astype(jnp.float32).reshape(M, 4)   # pred box 1
    p2 = pred4[..., 26:30].astype(jnp.float32).reshape(M, 4)   # pred box 2
    tb = targ4[..., 21:25].astype(jnp.float32).reshape(M, 4)   # target box

    # Channel-major (12, M): row i is one scalar channel across all cells.
    boxes = jnp.concatenate([p1, p2, tb], axis=1).T            # (12, M)

    # Fold cells into a (rows, 128) plane per channel; pad rows so the block
    # second-to-last dim is a multiple of 8 and divides the padded extent.
    rows = -(-M // _LANE)
    tile_rows = min(_MAX_TILE_ROWS, -(-rows // 8) * 8)
    rows_pad = -(-rows // tile_rows) * tile_rows
    m_pad = rows_pad * _LANE
    if m_pad != M:
        boxes = jnp.pad(boxes, ((0, 0), (0, m_pad - M)))
    boxes = boxes.reshape(12, rows_pad, _LANE)

    out = pl.pallas_call(
        _yolo_iou_kernel,
        out_shape=jax.ShapeDtypeStruct((2, rows_pad, _LANE), jnp.float32),
        grid=(rows_pad // tile_rows,),
        in_specs=[pl.BlockSpec((12, tile_rows, _LANE), lambda i: (0, i, 0))],
        out_specs=pl.BlockSpec((2, tile_rows, _LANE), lambda i: (0, i, 0)),
        compiler_params=pltpu.CompilerParams(
            dimension_semantics=("parallel",)),
    )(boxes)

    out_flat = out.reshape(2, m_pad)
    iou_maxes = out_flat[0, :M].reshape(N, S, S, 1)
    bestbox = out_flat[1, :M].astype(jnp.int32).reshape(N, S, S, 1)
    return iou_maxes, bestbox


def _reference(predictions, target):
    """Pure-JAX reference for correctness check."""
    pred = predictions.reshape(-1, S, S, CH)
    targ = target.reshape(-1, S, S, CH)

    def _iou(bp, bt):
        p_x1 = bp[..., 0:1] - bp[..., 2:3] / 2
        p_y1 = bp[..., 1:2] - bp[..., 3:4] / 2
        p_x2 = bp[..., 0:1] + bp[..., 2:3] / 2
        p_y2 = bp[..., 1:2] + bp[..., 3:4] / 2
        t_x1 = bt[..., 0:1] - bt[..., 2:3] / 2
        t_y1 = bt[..., 1:2] - bt[..., 3:4] / 2
        t_x2 = bt[..., 0:1] + bt[..., 2:3] / 2
        t_y2 = bt[..., 1:2] + bt[..., 3:4] / 2
        inter = jnp.clip(jnp.minimum(p_x2, t_x2) - jnp.maximum(p_x1, t_x1), 0) * \
                jnp.clip(jnp.minimum(p_y2, t_y2) - jnp.maximum(p_y1, t_y1), 0)
        a1 = jnp.abs((p_x2 - p_x1) * (p_y2 - p_y1))
        a2 = jnp.abs((t_x2 - t_x1) * (t_y2 - t_y1))
        return inter / (a1 + a2 - inter + 1e-6)

    iou1 = _iou(pred[..., 21:25], targ[..., 21:25])
    iou2 = _iou(pred[..., 26:30], targ[..., 21:25])
    ious = jnp.stack([iou1, iou2], axis=0)
    return jnp.max(ious, axis=0), jnp.argmax(ious, axis=0).astype(jnp.int32)


if __name__ == "__main__":
    key = jax.random.PRNGKey(0)
    kp, kt = jax.random.split(key)
    batch = 2
    predictions = jax.random.normal(kp, (batch, S * S * CH), dtype=jnp.float32)
    target = jax.random.normal(kt, (batch, S, S, CH), dtype=jnp.float32)

    iou_maxes, bestbox = yolo_loss_forward(predictions, target)
    jax.block_until_ready((iou_maxes, bestbox))

    ref_max, ref_best = _reference(predictions, target)
    assert iou_maxes.shape == (batch, S, S, 1)
    assert bestbox.shape == (batch, S, S, 1)
    assert jnp.allclose(iou_maxes, ref_max, atol=1e-5, rtol=1e-5)
    assert jnp.array_equal(bestbox, ref_best)

    print("KERNEL_OK")
</pallas_src>

<mosaic_0001>
module attributes {stable_mosaic.version = 11 : i64} {
  func.func @_yolo_iou_kernel(%arg0: i32, %arg1: memref<12x8x128xf32, #tpu.memory_space<vmem>>, %arg2: memref<2x8x128xf32, #tpu.memory_space<vmem>>) attributes {dimension_semantics = [#tpu.dimension_semantics<parallel>], iteration_bounds = array<i64: 1>, scalar_prefetch = 0 : i64, scratch_operands = 0 : i64, tpu.core_type = #tpu.core_type<tc>, window_params = [{transform_indices = @transform_0, window_bounds = array<i64: 12, 8, 128>}, {transform_indices = @transform_1, window_bounds = array<i64: 2, 8, 128>}]} {
    %c8 = arith.constant 8 : index
    %c0 = arith.constant 0 : index
    %c0_0 = arith.constant 0 : index
    %0 = vector.load %arg1[%c8, %c0, %c0_0] : memref<12x8x128xf32, #tpu.memory_space<vmem>>, vector<1x8x128xf32>
    %1 = vector.shape_cast %0 : vector<1x8x128xf32> to vector<8x128xf32>
    %c9 = arith.constant 9 : index
    %c0_1 = arith.constant 0 : index
    %c0_2 = arith.constant 0 : index
    %2 = vector.load %arg1[%c9, %c0_1, %c0_2] : memref<12x8x128xf32, #tpu.memory_space<vmem>>, vector<1x8x128xf32>
    %3 = vector.shape_cast %2 : vector<1x8x128xf32> to vector<8x128xf32>
    %c10 = arith.constant 10 : index
    %c0_3 = arith.constant 0 : index
    %c0_4 = arith.constant 0 : index
    %4 = vector.load %arg1[%c10, %c0_3, %c0_4] : memref<12x8x128xf32, #tpu.memory_space<vmem>>, vector<1x8x128xf32>
    %5 = vector.shape_cast %4 : vector<1x8x128xf32> to vector<8x128xf32>
    %c11 = arith.constant 11 : index
    %c0_5 = arith.constant 0 : index
    %c0_6 = arith.constant 0 : index
    %6 = vector.load %arg1[%c11, %c0_5, %c0_6] : memref<12x8x128xf32, #tpu.memory_space<vmem>>, vector<1x8x128xf32>
    %7 = vector.shape_cast %6 : vector<1x8x128xf32> to vector<8x128xf32>
    %cst = arith.constant 5.000000e-01 : f32
    %8 = vector.broadcast %cst : f32 to vector<8x128xf32>
    %9 = arith.mulf %5, %8 : vector<8x128xf32>
    %10 = arith.subf %1, %9 : vector<8x128xf32>
    %cst_7 = arith.constant 5.000000e-01 : f32
    %11 = vector.broadcast %cst_7 : f32 to vector<8x128xf32>
    %12 = arith.mulf %5, %11 : vector<8x128xf32>
    %13 = arith.addf %1, %12 : vector<8x128xf32>
    %cst_8 = arith.constant 5.000000e-01 : f32
    %14 = vector.broadcast %cst_8 : f32 to vector<8x128xf32>
    %15 = arith.mulf %7, %14 : vector<8x128xf32>
    %16 = arith.subf %3, %15 : vector<8x128xf32>
    %cst_9 = arith.constant 5.000000e-01 : f32
    %17 = vector.broadcast %cst_9 : f32 to vector<8x128xf32>
    %18 = arith.mulf %7, %17 : vector<8x128xf32>
    %19 = arith.addf %3, %18 : vector<8x128xf32>
    %20 = arith.subf %13, %10 : vector<8x128xf32>
    %21 = arith.subf %19, %16 : vector<8x128xf32>
    %22 = arith.mulf %20, %21 : vector<8x128xf32>
    %23 = math.absf %22 : vector<8x128xf32>
    %c0_10 = arith.constant 0 : index
    %c0_11 = arith.constant 0 : index
    %c0_12 = arith.constant 0 : index
    %24 = vector.load %arg1[%c0_10, %c0_11, %c0_12] : memref<12x8x128xf32, #tpu.memory_space<vmem>>, vector<1x8x128xf32>
    %25 = vector.shape_cast %24 : vector<1x8x128xf32> to vector<8x128xf32>
    %c1 = arith.constant 1 : index
    %c0_13 = arith.constant 0 : index
    %c0_14 = arith.constant 0 : index
    %26 = vector.load %arg1[%c1, %c0_13, %c0_14] : memref<12x8x128xf32, #tpu.memory_space<vmem>>, vector<1x8x128xf32>
    %27 = vector.shape_cast %26 : vector<1x8x128xf32> to vector<8x128xf32>
    %c2 = arith.constant 2 : index
    %c0_15 = arith.constant 0 : index
    %c0_16 = arith.constant 0 : index
    %28 = vector.load %arg1[%c2, %c0_15, %c0_16] : memref<12x8x128xf32, #tpu.memory_space<vmem>>, vector<1x8x128xf32>
    %29 = vector.shape_cast %28 : vector<1x8x128xf32> to vector<8x128xf32>
    %c3 = arith.constant 3 : index
    %c0_17 = arith.constant 0 : index
    %c0_18 = arith.constant 0 : index
    %30 = vector.load %arg1[%c3, %c0_17, %c0_18] : memref<12x8x128xf32, #tpu.memory_space<vmem>>, vector<1x8x128xf32>
    %31 = vector.shape_cast %30 : vector<1x8x128xf32> to vector<8x128xf32>
    %cst_19 = arith.constant 5.000000e-01 : f32
    %32 = vector.broadcast %cst_19 : f32 to vector<8x128xf32>
    %33 = arith.mulf %29, %32 : vector<8x128xf32>
    %34 = arith.subf %25, %33 : vector<8x128xf32>
    %cst_20 = arith.constant 5.000000e-01 : f32
    %35 = vector.broadcast %cst_20 : f32 to vector<8x128xf32>
    %36 = arith.mulf %29, %35 : vector<8x128xf32>
    %37 = arith.addf %25, %36 : vector<8x128xf32>
    %cst_21 = arith.constant 5.000000e-01 : f32
    %38 = vector.broadcast %cst_21 : f32 to vector<8x128xf32>
    %39 = arith.mulf %31, %38 : vector<8x128xf32>
    %40 = arith.subf %27, %39 : vector<8x128xf32>
    %cst_22 = arith.constant 5.000000e-01 : f32
    %41 = vector.broadcast %cst_22 : f32 to vector<8x128xf32>
    %42 = arith.mulf %31, %41 : vector<8x128xf32>
    %43 = arith.addf %27, %42 : vector<8x128xf32>
    %44 = arith.minimumf %37, %13 : vector<8x128xf32>
    %45 = arith.maximumf %34, %10 : vector<8x128xf32>
    %46 = arith.subf %44, %45 : vector<8x128xf32>
    %cst_23 = arith.constant 0.000000e+00 : f32
    %47 = vector.broadcast %cst_23 : f32 to vector<8x128xf32>
    %48 = arith.maximumf %46, %47 : vector<8x128xf32>
    %49 = arith.minimumf %43, %19 : vector<8x128xf32>
    %50 = arith.maximumf %40, %16 : vector<8x128xf32>
    %51 = arith.subf %49, %50 : vector<8x128xf32>
    %cst_24 = arith.constant 0.000000e+00 : f32
    %52 = vector.broadcast %cst_24 : f32 to vector<8x128xf32>
    %53 = arith.maximumf %51, %52 : vector<8x128xf32>
    %54 = arith.mulf %48, %53 : vector<8x128xf32>
    %55 = arith.subf %37, %34 : vector<8x128xf32>
    %56 = arith.subf %43, %40 : vector<8x128xf32>
    %57 = arith.mulf %55, %56 : vector<8x128xf32>
    %58 = math.absf %57 : vector<8x128xf32>
    %59 = arith.addf %58, %23 : vector<8x128xf32>
    %60 = arith.subf %59, %54 : vector<8x128xf32>
    %cst_25 = arith.constant 9.99999997E-7 : f32
    %61 = vector.broadcast %cst_25 : f32 to vector<8x128xf32>
    %62 = arith.addf %60, %61 : vector<8x128xf32>
    %63 = arith.divf %54, %62 : vector<8x128xf32>
    %c4 = arith.constant 4 : index
    %c0_26 = arith.constant 0 : index
    %c0_27 = arith.constant 0 : index
    %64 = vector.load %arg1[%c4, %c0_26, %c0_27] : memref<12x8x128xf32, #tpu.memory_space<vmem>>, vector<1x8x128xf32>
    %65 = vector.shape_cast %64 : vector<1x8x128xf32> to vector<8x128xf32>
    %c5 = arith.constant 5 : index
    %c0_28 = arith.constant 0 : index
    %c0_29 = arith.constant 0 : index
    %66 = vector.load %arg1[%c5, %c0_28, %c0_29] : memref<12x8x128xf32, #tpu.memory_space<vmem>>, vector<1x8x128xf32>
    %67 = vector.shape_cast %66 : vector<1x8x128xf32> to vector<8x128xf32>
    %c6 = arith.constant 6 : index
    %c0_30 = arith.constant 0 : index
    %c0_31 = arith.constant 0 : index
    %68 = vector.load %arg1[%c6, %c0_30, %c0_31] : memref<12x8x128xf32, #tpu.memory_space<vmem>>, vector<1x8x128xf32>
    %69 = vector.shape_cast %68 : vector<1x8x128xf32> to vector<8x128xf32>
    %c7 = arith.constant 7 : index
    %c0_32 = arith.constant 0 : index
    %c0_33 = arith.constant 0 : index
    %70 = vector.load %arg1[%c7, %c0_32, %c0_33] : memref<12x8x128xf32, #tpu.memory_space<vmem>>, vector<1x8x128xf32>
    %71 = vector.shape_cast %70 : vector<1x8x128xf32> to vector<8x128xf32>
    %cst_34 = arith.constant 5.000000e-01 : f32
    %72 = vector.broadcast %cst_34 : f32 to vector<8x128xf32>
    %73 = arith.mulf %69, %72 : vector<8x128xf32>
    %74 = arith.subf %65, %73 : vector<8x128xf32>
    %cst_35 = arith.constant 5.000000e-01 : f32
    %75 = vector.broadcast %cst_35 : f32 to vector<8x128xf32>
    %76 = arith.mulf %69, %75 : vector<8x128xf32>
    %77 = arith.addf %65, %76 : vector<8x128xf32>
    %cst_36 = arith.constant 5.000000e-01 : f32
    %78 = vector.broadcast %cst_36 : f32 to vector<8x128xf32>
    %79 = arith.mulf %71, %78 : vector<8x128xf32>
    %80 = arith.subf %67, %79 : vector<8x128xf32>
    %cst_37 = arith.constant 5.000000e-01 : f32
    %81 = vector.broadcast %cst_37 : f32 to vector<8x128xf32>
    %82 = arith.mulf %71, %81 : vector<8x128xf32>
    %83 = arith.addf %67, %82 : vector<8x128xf32>
    %84 = arith.minimumf %77, %13 : vector<8x128xf32>
    %85 = arith.maximumf %74, %10 : vector<8x128xf32>
    %86 = arith.subf %84, %85 : vector<8x128xf32>
    %cst_38 = arith.constant 0.000000e+00 : f32
    %87 = vector.broadcast %cst_38 : f32 to vector<8x128xf32>
    %88 = arith.maximumf %86, %87 : vector<8x128xf32>
    %89 = arith.minimumf %83, %19 : vector<8x128xf32>
    %90 = arith.maximumf %80, %16 : vector<8x128xf32>
    %91 = arith.subf %89, %90 : vector<8x128xf32>
    %cst_39 = arith.constant 0.000000e+00 : f32
    %92 = vector.broadcast %cst_39 : f32 to vector<8x128xf32>
    %93 = arith.maximumf %91, %92 : vector<8x128xf32>
    %94 = arith.mulf %88, %93 : vector<8x128xf32>
    %95 = arith.subf %77, %74 : vector<8x128xf32>
    %96 = arith.subf %83, %80 : vector<8x128xf32>
    %97 = arith.mulf %95, %96 : vector<8x128xf32>
    %98 = math.absf %97 : vector<8x128xf32>
    %99 = arith.addf %98, %23 : vector<8x128xf32>
    %100 = arith.subf %99, %94 : vector<8x128xf32>
    %cst_40 = arith.constant 9.99999997E-7 : f32
    %101 = vector.broadcast %cst_40 : f32 to vector<8x128xf32>
    %102 = arith.addf %100, %101 : vector<8x128xf32>
    %103 = arith.divf %94, %102 : vector<8x128xf32>
    %104 = arith.maximumf %63, %103 : vector<8x128xf32>
    %c0_41 = arith.constant 0 : index
    %c0_42 = arith.constant 0 : index
    %c0_43 = arith.constant 0 : index
    %105 = vector.load %arg2[%c0_41, %c0_42, %c0_43] : memref<2x8x128xf32, #tpu.memory_space<vmem>>, vector<1x8x128xf32>
    %106 = vector.shape_cast %105 : vector<1x8x128xf32> to vector<8x128xf32>
    %107 = vector.shape_cast %104 : vector<8x128xf32> to vector<1x8x128xf32>
    tpu.vector_store %arg2[%c0_41, %c0_42, %c0_43], %107 {strides = array<i32>} : memref<2x8x128xf32, #tpu.memory_space<vmem>>, vector<1x8x128xf32>,
    %108 = arith.cmpf ogt, %103, %63 : vector<8x128xf32>
    %109 = arith.extui %108 : vector<8x128xi1> to vector<8x128xi32>
    %110 = arith.sitofp %109 : vector<8x128xi32> to vector<8x128xf32>
    %c1_44 = arith.constant 1 : index
    %c0_45 = arith.constant 0 : index
    %c0_46 = arith.constant 0 : index
    %111 = vector.load %arg2[%c1_44, %c0_45, %c0_46] : memref<2x8x128xf32, #tpu.memory_space<vmem>>, vector<1x8x128xf32>
    %112 = vector.shape_cast %111 : vector<1x8x128xf32> to vector<8x128xf32>
    %113 = vector.shape_cast %110 : vector<8x128xf32> to vector<1x8x128xf32>
    tpu.vector_store %arg2[%c1_44, %c0_45, %c0_46], %113 {strides = array<i32>} : memref<2x8x128xf32, #tpu.memory_space<vmem>>, vector<1x8x128xf32>,
    return
  }
  func.func @transform_0(%arg0: i32) -> (i32, i32, i32) {
    %c0_i32 = arith.constant 0 : i32
    %c0_i32_0 = arith.constant 0 : i32
    %c0_i32_1 = arith.constant 0 : i32
    return %c0_i32, %arg0, %c0_i32_0 : i32, i32, i32
  }
  func.func @transform_1(%arg0: i32) -> (i32, i32, i32) {
    %c0_i32 = arith.constant 0 : i32
    %c0_i32_0 = arith.constant 0 : i32
    %c0_i32_1 = arith.constant 0 : i32
    return %c0_i32, %arg0, %c0_i32_0 : i32, i32, i32
  }
}

</mosaic_0001>

<llo_original>
// kernel: tpu_custom_call.1
$region0: #{tpu_custom_call.1}
  #allocation0 [shape = 'u32[]', space=smem, size = 0x4, offset = 0x4, fixed_abs, tag = 'smem constant byte address 0x4 - core index']
  #allocation1 [shape = 'u32[144,128]{1,0:T(1,128)}', space=vmem, size = 0x12000, scoped, tag = 'internal scratch']
  %s0 = inlined_call_operand.hbm [shape: f32[12,8,128], index: 0, kind: input, shape index: {}]
  %s1 = inlined_call_operand.hbm [shape: f32[2,8,128], index: 1, kind: output, shape index: {}]
  %s2 = sld [smem:[#allocation0]]
  $region18: #{tpu_custom_call.1} parent=0
    _
  %s4 = ssub.s32 1, %s2
  %s5 = scalar_select 0, %s4, %s2
  $region1: #{tpu_custom_call.1} parent=0
    #allocation2 [shape = 'u8[49152]{0}', space=vmem, size = 0xc000, scoped, tag = 'input window, operand 0, single buffered']
    #allocation3 [shape = 's32[1]{0}', space=sflag, size = 0x4, scoped, tag = 'scoped memory for tpu_custom_call.1']
    #allocation4 [shape = 's32[1]{0}', space=sflag, size = 0x4, scoped, tag = 'scoped memory for tpu_custom_call.1']
    #allocation5 [shape = 'u8[8192]{0}', space=vmem, size = 0x2000, scoped, tag = 'output window, operand 0, single buffered']
    %6 = vsyncpa [#allocation3], 0
    %7 = vsyncpa [#allocation4], 0
    // Predicated region
    $region2: #{tpu_custom_call.1} parent=1 // pred_check
      _
    $region3: #{tpu_custom_call.1} parent=1 // pred_check_branch
      %9 = sbr.rel (0) target = $region5
    $region4: #{tpu_custom_call.1} parent=1 // pred_region
      %s11 = ssub.s32 1536, 1536
      %12 = vsyncadd [#allocation3], %s11
      %s13 = sshll.u32 [#allocation2], 4
      %s14 = int_to_ptr.vmem [resolvable:$true] %s13
      %19 = dma.hbm_to_vmem [thread:$0]  %s0, 1536, %s14, [#allocation3], 128, 128, 8
    $region5: #{tpu_custom_call.1} parent=1 // pred_fallthru
      _
    // Predicated region
    $region6: #{tpu_custom_call.1} parent=1 // pred_check
      _
    $region7: #{tpu_custom_call.1} parent=1 // pred_check_branch
      %21 = sbr.rel (0) target = $region9
    $region8: #{tpu_custom_call.1} parent=1 // pred_region
      %22 = dma.done [#allocation3], 1536
    $region9: #{tpu_custom_call.1} parent=1 // pred_fallthru
      _
    %s23 = scalar_lea.vmem [#allocation2], 64
    %v24 = vld [vmem:[%s23] sm:$0xff]
    %s25 = scalar_lea.vmem [#allocation2], 72
    %v26 = vld [vmem:[%s25] sm:$0xff]
    %s27 = scalar_lea.vmem [#allocation2], 80
    %v28 = vld [vmem:[%s27] sm:$0xff]
    %s29 = scalar_lea.vmem [#allocation2], 88
    %v30 = vld [vmem:[%s29] sm:$0xff]
    %v31 = vmul.f32 %v28, 0.5
    %v32 = vsub.f32 %v24, %v31
    %v33 = vadd.f32 %v24, %v31
    %v34 = vmul.f32 %v30, 0.5
    %v35 = vsub.f32 %v26, %v34
    %v36 = vadd.f32 %v26, %v34
    %v37 = vsub.f32 %v33, %v32
    %v38 = vsub.f32 %v36, %v35
    %v39 = vmul.f32 %v37, %v38
    %v40 = vand.u32 2147483647, %v39
    %v41 = vld [vmem:[#allocation2] sm:$0xff]
    %s42 = scalar_lea.vmem [#allocation2], 8
    %v43 = vld [vmem:[%s42] sm:$0xff]
    %s44 = scalar_lea.vmem [#allocation2], 16
    %v45 = vld [vmem:[%s44] sm:$0xff]
    %s46 = scalar_lea.vmem [#allocation2], 24
    %v47 = vld [vmem:[%s46] sm:$0xff]
    %v48 = vmul.f32 %v45, 0.5
    %v49 = vsub.f32 %v41, %v48
    %v50 = vadd.f32 %v41, %v48
    %v51 = vmul.f32 %v47, 0.5
    %v52 = vsub.f32 %v43, %v51
    %v53 = vadd.f32 %v43, %v51
    %v54 = vmin.f32 %v50, %v33
    %v55 = vmax.f32 %v49, %v32
    %v56 = vsub.f32 %v54, %v55
    %v57 = vmax.f32 %v56, 0.0
    %v58 = vmin.f32 %v53, %v36
    %v59 = vmax.f32 %v52, %v35
    %v60 = vsub.f32 %v58, %v59
    %v61 = vmax.f32 %v60, 0.0
    %v62 = vmul.f32 %v57, %v61
    %v63 = vsub.f32 %v50, %v49
    %v64 = vsub.f32 %v53, %v52
    %v65 = vmul.f32 %v63, %v64
    %v66 = vand.u32 2147483647, %v65
    %v67 = vadd.f32 %v66, %v40
    %v68 = vsub.f32 %v67, %v62
    %v69 = vadd.f32 %v68, 1e-06
    %v70 = vrcp.pop %v69
    %v71 = vmul.f32 %v62, %v70
    %s72 = scalar_lea.vmem [#allocation2], 32
    %v73 = vld [vmem:[%s72] sm:$0xff]
    %s74 = scalar_lea.vmem [#allocation2], 40
    %v75 = vld [vmem:[%s74] sm:$0xff]
    %s76 = scalar_lea.vmem [#allocation2], 48
    %v77 = vld [vmem:[%s76] sm:$0xff]
    %s78 = scalar_lea.vmem [#allocation2], 56
    %v79 = vld [vmem:[%s78] sm:$0xff]
    %v80 = vmul.f32 %v77, 0.5
    %v81 = vsub.f32 %v73, %v80
    %v82 = vadd.f32 %v73, %v80
    %v83 = vmul.f32 %v79, 0.5
    %v84 = vsub.f32 %v75, %v83
    %v85 = vadd.f32 %v75, %v83
    %v86 = vmin.f32 %v82, %v33
    %v87 = vmax.f32 %v81, %v32
    %v88 = vsub.f32 %v86, %v87
    %v89 = vmax.f32 %v88, 0.0
    %v90 = vmin.f32 %v85, %v36
    %v91 = vmax.f32 %v84, %v35
    %v92 = vsub.f32 %v90, %v91
    %v93 = vmax.f32 %v92, 0.0
    %v94 = vmul.f32 %v89, %v93
    %v95 = vsub.f32 %v82, %v81
    %v96 = vsub.f32 %v85, %v84
    %v97 = vmul.f32 %v95, %v96
    %v98 = vand.u32 2147483647, %v97
    %v99 = vadd.f32 %v98, %v40
    %v100 = vsub.f32 %v99, %v94
    %v101 = vadd.f32 %v100, 1e-06
    %v102 = vrcp.pop %v101
    %v103 = vmul.f32 %v94, %v102
    %v104 = vmax.f32 %v71, %v103
    %105 = vst [vmem:[#allocation5] sm:$0xff] %v104
    %vm106 = vcmp.gt.f32.partialorder %v103, %v71
    %v107 = vsel %vm106, 1, 0
    %v108 = vcvt.s32.f32 %v107
    %s109 = scalar_lea.vmem [#allocation5], 8
    %110 = vst [vmem:[%s109] sm:$0xff] %v108
    // Predicated region
    $region10: #{tpu_custom_call.1} parent=1 // pred_check
      _
    $region11: #{tpu_custom_call.1} parent=1 // pred_check_branch
      %112 = sbr.rel (0) target = $region13
    $region12: #{tpu_custom_call.1} parent=1 // pred_region
      %s114 = ssub.s32 256, 256
      %115 = vsyncadd [#allocation4], %s114
      %s116 = sshll.u32 [#allocation5], 4
      %s117 = int_to_ptr.vmem [resolvable:$true] %s116
      %122 = dma.vmem_to_hbm [thread:$0]  %s117, 256, %s1, [#allocation4], 128, 128, 8
    $region13: #{tpu_custom_call.1} parent=1 // pred_fallthru
      _
    // Predicated region
    $region14: #{tpu_custom_call.1} parent=1 // pred_check
      _
    $region15: #{tpu_custom_call.1} parent=1 // pred_check_branch
      %124 = sbr.rel (0) target = $region17
    $region16: #{tpu_custom_call.1} parent=1 // pred_region
      %125 = dma.done [#allocation4], 256
    $region17: #{tpu_custom_call.1} parent=1 // pred_fallthru
      _
    %126 = vsyncpa [#allocation3], 1
    %127 = vsyncpa [#allocation4], 1

</llo_original>
